<compile_context>
chip_gen: v7x
topology: tpu7x:2x2x1
jax: 0.10.0
libtpu: 0.0.40
codegen_flags: <defaults>
</compile_context>

<pallas_src>
import jax
import jax.numpy as jnp
import numpy as np
from jax.experimental import pallas as pl
from jax.experimental.pallas import tpu as pltpu


_TARGET_BLOCK_BYTES = 2 << 20   # ~2 MiB per input block (1-4 MiB sweet spot)
_VMEM_LIMIT_CAP = 48 << 20      # safe on v7x (64 MiB physical VMEM per TC)
_VMEM_LIMIT_FLOOR = 24 << 20


def _vmem_limit(block_bytes):
    # in + out, double-buffered, plus f32 compute temps / Mosaic scratch headroom.
    return int(min(_VMEM_LIMIT_CAP, max(_VMEM_LIMIT_FLOOR, 10 * block_bytes)))


def _make_lane_norm_kernel(power):
    """Lp-normalize each row of a (tm, D) tile; reduction over the lane axis."""

    def kernel(x_ref, o_ref):
        x = x_ref[...].astype(jnp.float32)
        if power == 2:
            ss = jnp.sum(x * x, axis=-1, keepdims=True)   # XLU cross-lane reduce
            inv = jax.lax.rsqrt(ss)                        # EUP rsqrt (free slot)
        else:
            # fused root + reciprocal: out = x * sum(x**p) ** (-1/p)
            inv = jnp.sum(x ** power, axis=-1, keepdims=True) ** (-1.0 / power)
        o_ref[...] = (x * inv).astype(o_ref.dtype)

    return kernel


def _make_channel_norm_kernel(power):
    """Lp-normalize over the channel (sublane) axis of a (1, C, ts) tile."""

    def kernel(x_ref, o_ref):
        x = x_ref[...].astype(jnp.float32)
        if power == 2:
            ss = jnp.sum(x * x, axis=-2, keepdims=True)    # sublane-axis reduce
            inv = jax.lax.rsqrt(ss)
        else:
            inv = jnp.sum(x ** power, axis=-2, keepdims=True) ** (-1.0 / power)
        o_ref[...] = (x * inv).astype(o_ref.dtype)

    return kernel


def _normalize_2d(x2, power):
    """Normalize each row of a (N, D) array; full D per tile, rows tiled by bytes."""
    n, d = x2.shape
    itemsize = jnp.dtype(x2.dtype).itemsize
    bytes_per_row = max(d * itemsize, 1)

    tm_target = max(8, _TARGET_BLOCK_BYTES // bytes_per_row)
    if tm_target >= n:
        tm = n                               # full dim -> always layout-legal
    else:
        tm = max(8, (tm_target // 8) * 8)    # multiple of 8 sublanes

    grid = (pl.cdiv(n, tm),)                 # ragged last block: OOB writes dropped
    block_bytes = tm * d * itemsize

    return pl.pallas_call(
        _make_lane_norm_kernel(power),
        out_shape=jax.ShapeDtypeStruct((n, d), x2.dtype),
        grid_spec=pltpu.PrefetchScalarGridSpec(
            num_scalar_prefetch=0,
            grid=grid,
            in_specs=[pl.BlockSpec((tm, d), lambda i: (i, 0))],
            out_specs=pl.BlockSpec((tm, d), lambda i: (i, 0)),
        ),
        compiler_params=pltpu.CompilerParams(
            dimension_semantics=("parallel",),
            vmem_limit_bytes=_vmem_limit(block_bytes),
        ),
    )(x2)


def _normalize_channels(x3, power):
    """Normalize over the channel axis of a (B, C, S) array; S stays on lanes."""
    b, c, s = x3.shape
    itemsize = jnp.dtype(x3.dtype).itemsize
    bytes_per_col = max(c * itemsize, 1)

    ts_target = max(128, _TARGET_BLOCK_BYTES // bytes_per_col)
    if ts_target >= s:
        ts = s                               # full dim -> always layout-legal
    else:
        ts = max(128, (ts_target // 128) * 128)   # lane-dense multiple of 128

    grid = (b, pl.cdiv(s, ts))
    block_bytes = c * ts * itemsize

    return pl.pallas_call(
        _make_channel_norm_kernel(power),
        out_shape=jax.ShapeDtypeStruct((b, c, s), x3.dtype),
        grid_spec=pltpu.PrefetchScalarGridSpec(
            num_scalar_prefetch=0,
            grid=grid,
            in_specs=[pl.BlockSpec((1, c, ts), lambda i, j: (i, 0, j))],
            out_specs=pl.BlockSpec((1, c, ts), lambda i, j: (i, 0, j)),
        ),
        compiler_params=pltpu.CompilerParams(
            dimension_semantics=("parallel", "parallel"),
            vmem_limit_bytes=_vmem_limit(block_bytes),
        ),
    )(x3)


def normalize_forward(x, power=2):
    """Pallas equivalent of Normalize.forward (normalizes along dim 1)."""
    if x.ndim < 2:
        raise ValueError("Normalize expects input with at least 2 dims")
    if x.ndim == 2:
        # dim 1 is already the last (lane) axis.
        return _normalize_2d(x, power)

    # N-D (e.g. NCHW): flatten spatial dims into one lane axis.  This reshape is
    # a zero-copy metadata change (row-major contiguous); no transpose traffic.
    b, c = x.shape[0], x.shape[1]
    s = int(np.prod(x.shape[2:]))
    x3 = x.reshape(b, c, s)
    out = _normalize_channels(x3, power)
    return out.reshape(x.shape)


if __name__ == "__main__":
    key = jax.random.PRNGKey(0)
    k1, k2, k3 = jax.random.split(key, 3)

    # Typical use in the distiller repo: L2-normalize an embedding (B, D).
    B, D = 16, 128
    x = jax.random.normal(k1, (B, D), dtype=jnp.float32)
    out = jax.block_until_ready(normalize_forward(x, power=2))
    ref = x / jnp.sqrt(jnp.sum(x * x, axis=1, keepdims=True))
    assert out.shape == (B, D)
    assert jnp.allclose(out, ref, atol=1e-5, rtol=1e-5)

    # N-D path: channel-wise normalization of an NCHW tensor, no transposes.
    x4 = jax.random.normal(k2, (2, 4, 16, 16), dtype=jnp.float32)
    out4 = jax.block_until_ready(normalize_forward(x4, power=2))
    ref4 = x4 / jnp.sqrt(jnp.sum(x4 * x4, axis=1, keepdims=True))
    assert out4.shape == x4.shape
    assert jnp.allclose(out4, ref4, atol=1e-5, rtol=1e-5)

    # General (integer) power path: fused sum(x**p) ** (-1/p).
    x5 = jax.random.normal(k3, (8, 128), dtype=jnp.float32)
    out5 = jax.block_until_ready(normalize_forward(x5, power=4))
    ref5 = x5 / (jnp.sum(x5 ** 4, axis=1, keepdims=True) ** 0.25)
    assert jnp.allclose(out5, ref5, atol=1e-5, rtol=1e-5)

    print("KERNEL_OK")
</pallas_src>

<mosaic_0001>
module attributes {stable_mosaic.version = 11 : i64} {
  func.func @kernel(%arg0: i32, %arg1: memref<16x128xf32, #tpu.memory_space<vmem>>, %arg2: memref<16x128xf32, #tpu.memory_space<vmem>>) attributes {dimension_semantics = [#tpu.dimension_semantics<parallel>], iteration_bounds = array<i64: 1>, scalar_prefetch = 0 : i64, scratch_operands = 0 : i64, tpu.core_type = #tpu.core_type<tc>, window_params = [{transform_indices = @transform_0, window_bounds = array<i64: 16, 128>}, {transform_indices = @transform_1, window_bounds = array<i64: 16, 128>}]} {
    %c0 = arith.constant 0 : index
    %c0_0 = arith.constant 0 : index
    %0 = vector.load %arg1[%c0, %c0_0] : memref<16x128xf32, #tpu.memory_space<vmem>>, vector<16x128xf32>
    %1 = arith.mulf %0, %0 : vector<16x128xf32>
    %cst = arith.constant dense<0.000000e+00> : vector<16xf32>
    %2 = vector.multi_reduction <add>, %1, %cst [1] : vector<16x128xf32> to vector<16xf32>
    %3 = vector.shape_cast %2 : vector<16xf32> to vector<16x1xf32>
    %4 = math.rsqrt %3 : vector<16x1xf32>
    %5 = vector.broadcast %4 : vector<16x1xf32> to vector<16x128xf32>
    %6 = arith.mulf %0, %5 : vector<16x128xf32>
    %c0_1 = arith.constant 0 : index
    %c0_2 = arith.constant 0 : index
    %7 = vector.load %arg2[%c0_1, %c0_2] : memref<16x128xf32, #tpu.memory_space<vmem>>, vector<16x128xf32>
    tpu.vector_store %arg2[%c0_1, %c0_2], %6 {strides = array<i32>} : memref<16x128xf32, #tpu.memory_space<vmem>>, vector<16x128xf32>,
    return
  }
  func.func @transform_0(%arg0: i32) -> (i32, i32) {
    %c0_i32 = arith.constant 0 : i32
    %c0_i32_0 = arith.constant 0 : i32
    return %arg0, %c0_i32 : i32, i32
  }
  func.func @transform_1(%arg0: i32) -> (i32, i32) {
    %c0_i32 = arith.constant 0 : i32
    %c0_i32_0 = arith.constant 0 : i32
    return %arg0, %c0_i32 : i32, i32
  }
}

</mosaic_0001>

<llo_original>
// kernel: tpu_custom_call.1
$region0: #{tpu_custom_call.1}
  #allocation0 [shape = 'u32[]', space=smem, size = 0x4, offset = 0x4, fixed_abs, tag = 'smem constant byte address 0x4 - core index']
  #allocation1 [shape = 'u32[144,128]{1,0:T(1,128)}', space=vmem, size = 0x12000, scoped, tag = 'internal scratch']
  %s0 = inlined_call_operand.hbm [shape: f32[16,128], index: 0, kind: input, shape index: {}]
  %s1 = inlined_call_operand.hbm [shape: f32[16,128], index: 1, kind: output, shape index: {}]
  %s2 = sld [smem:[#allocation0]]
  $region18: #{tpu_custom_call.1} parent=0
    _
  %s4 = ssub.s32 1, %s2
  %s5 = scalar_select 0, %s4, %s2
  $region1: #{tpu_custom_call.1} parent=0
    #allocation2 [shape = 'u8[8192]{0}', space=vmem, size = 0x2000, scoped, tag = 'input window, operand 0, single buffered']
    #allocation3 [shape = 's32[1]{0}', space=sflag, size = 0x4, scoped, tag = 'scoped memory for tpu_custom_call.1']
    #allocation4 [shape = 's32[1]{0}', space=sflag, size = 0x4, scoped, tag = 'scoped memory for tpu_custom_call.1']
    #allocation5 [shape = 'u8[8192]{0}', space=vmem, size = 0x2000, scoped, tag = 'output window, operand 0, single buffered']
    %6 = vsyncpa [#allocation3], 0
    %7 = vsyncpa [#allocation4], 0
    // Predicated region
    $region2: #{tpu_custom_call.1} parent=1 // pred_check
      _
    $region3: #{tpu_custom_call.1} parent=1 // pred_check_branch
      %9 = sbr.rel (0) target = $region5
    $region4: #{tpu_custom_call.1} parent=1 // pred_region
      %s11 = ssub.s32 256, 256
      %12 = vsyncadd [#allocation3], %s11
      %s13 = sshll.u32 [#allocation2], 4
      %s14 = int_to_ptr.vmem [resolvable:$true] %s13
      %19 = dma.hbm_to_vmem [thread:$0]  %s0, 256, %s14, [#allocation3], 128, 128, 8
    $region5: #{tpu_custom_call.1} parent=1 // pred_fallthru
      _
    // Predicated region
    $region6: #{tpu_custom_call.1} parent=1 // pred_check
      _
    $region7: #{tpu_custom_call.1} parent=1 // pred_check_branch
      %21 = sbr.rel (0) target = $region9
    $region8: #{tpu_custom_call.1} parent=1 // pred_region
      %22 = dma.done [#allocation3], 256
    $region9: #{tpu_custom_call.1} parent=1 // pred_fallthru
      _
    %v23 = vld [vmem:[#allocation2] sm:$0xff]
    %v24 = vld [vmem:[#allocation2 + $0x8] sm:$0xff]
    %v25 = vmul.f32 %v23, %v23
    %v26 = vmul.f32 %v24, %v24
    %27 = vadd.xlane.f32.xlu0 %v25
    %v28 = vpop.xlane.xlu0 %27
    %29 = vadd.xlane.f32.xlu0 %v26
    %v30 = vpop.xlane.xlu0 %29
    %v31 = vrsqrt.pop %v28
    %v32 = vrsqrt.pop %v30
    %v33 = vmul.f32 %v23, %v31
    %v34 = vmul.f32 %v24, %v32
    %35 = vst [vmem:[#allocation5] sm:$0xff] %v33
    %36 = vst [vmem:[#allocation5 + $0x8] sm:$0xff] %v34
    // Predicated region
    $region10: #{tpu_custom_call.1} parent=1 // pred_check
      _
    $region11: #{tpu_custom_call.1} parent=1 // pred_check_branch
      %38 = sbr.rel (0) target = $region13
    $region12: #{tpu_custom_call.1} parent=1 // pred_region
      %s40 = ssub.s32 256, 256
      %41 = vsyncadd [#allocation4], %s40
      %s42 = sshll.u32 [#allocation5], 4
      %s43 = int_to_ptr.vmem [resolvable:$true] %s42
      %48 = dma.vmem_to_hbm [thread:$0]  %s43, 256, %s1, [#allocation4], 128, 128, 8
    $region13: #{tpu_custom_call.1} parent=1 // pred_fallthru
      _
    // Predicated region
    $region14: #{tpu_custom_call.1} parent=1 // pred_check
      _
    $region15: #{tpu_custom_call.1} parent=1 // pred_check_branch
      %50 = sbr.rel (0) target = $region17
    $region16: #{tpu_custom_call.1} parent=1 // pred_region
      %51 = dma.done [#allocation4], 256
    $region17: #{tpu_custom_call.1} parent=1 // pred_fallthru
      _
    %52 = vsyncpa [#allocation3], 1
    %53 = vsyncpa [#allocation4], 1

</llo_original>
